<compile_context>
chip_gen: v7x
topology: tpu7x:2x2x1
jax: 0.10.0
libtpu: 0.0.40
codegen_flags: <defaults>
</compile_context>

<pallas_src>
import functools

import jax
import jax.numpy as jnp
from jax.experimental import pallas as pl
from jax.experimental.pallas import tpu as pltpu


def _round_up(x, m):
    return ((x + m - 1) // m) * m


# Grid-invariant inputs (weights/biases) only need one VMEM buffer; the default
# pipeline double-buffers every input. Detect pipeline_mode support once so we
# can halve the resident-weight footprint (matters most on v7x's 64 MiB VMEM)
# while staying compatible with older jax.
try:
    pl.BlockSpec((8, 128), lambda i: (0, 0), pipeline_mode=pl.Buffered(1))
    _INVARIANT_KW = {"pipeline_mode": pl.Buffered(1)}
    _WEIGHT_BUFFERS = 1
except Exception:  # older jax without pipeline_mode / Buffered
    _INVARIANT_KW = {}
    _WEIGHT_BUFFERS = 2


def _mlp_fused_kernel(*refs, num_layers, neg_slope, compute_dtype):
    """One grid step: push a (tile_n, in_dim) batch slab through every layer.

    refs = (x_ref, w0, b0, ..., w_{L-1}, b_{L-1}, o_ref). Weights arrive as
    (in, out) tiles (pre-transposed in the wrapper) so the MXU consumes them
    without an XLU transpose; intermediate activations never leave vregs.
    """
    x_ref = refs[0]
    o_ref = refs[-1]
    wb = refs[1:-1]

    y = x_ref[...]
    for i in range(num_layers):
        if i > 0:
            # LeakyReLU with 0 < slope < 1: max(y, slope*y) == where(y>=0, y, slope*y)
            # but lowers to mul+max (2 VALU ops) instead of cmp+select+mul (3).
            y = jnp.maximum(y, y * neg_slope)
        y = jnp.dot(y.astype(compute_dtype), wb[2 * i][...],
                    preferred_element_type=jnp.float32) + wb[2 * i + 1][...]
    o_ref[...] = y.astype(o_ref.dtype)


def _linear_kernel(x_ref, w_ref, b_ref, o_ref, *, apply_act, neg_slope, compute_dtype):
    """Fallback per-layer kernel: (LeakyReLU ∘) Linear on one (batch, out) tile."""
    y = x_ref[...]
    if apply_act:
        y = jnp.maximum(y, y * neg_slope)
    o_ref[...] = (jnp.dot(y.astype(compute_dtype), w_ref[...],
                          preferred_element_type=jnp.float32)
                  + b_ref[...]).astype(o_ref.dtype)


def _fused_vmem_bytes(tile_n, in_dim, out_store, params, w_bytes):
    """Rough VMEM footprint of the fused all-weights-resident kernel."""
    total = 2 * tile_n * in_dim * 4           # x tile, double-buffered
    total += 2 * tile_n * out_store * 4       # out tile, double-buffered
    max_w = in_dim
    for w, _ in params:
        total += _WEIGHT_BUFFERS * (int(w.size) * w_bytes + w.shape[0] * 4)
        max_w = max(max_w, w.shape[0], w.shape[1])
    total += 2 * tile_n * max_w * 4           # live activation working set / slack
    return total


def _mlp_forward_layered(x, params, neg_slope, compute_dtype,
                         max_tile_n=256, max_tile_out=512):
    """VMEM-budget fallback: one pallas_call per layer, tiled over (batch, out feats).

    Each layer's out-features are zero-padded to a multiple of the out tile; the
    padded columns stay exactly zero through LeakyReLU and multiply zero-padded
    weight rows of the next layer, so numerics are unchanged.
    """
    n = x.shape[0]
    tile_n = max(8, (min(_round_up(n, 8), max_tile_n) // 8) * 8)
    n_pad = _round_up(n, tile_n)
    y = jnp.pad(x, ((0, n_pad - n), (0, 0))) if n_pad != n else x
    y = y.astype(jnp.float32)

    for li, (w, b) in enumerate(params):
        out_dim, in_dim = w.shape
        in_cur = y.shape[1]                              # may carry zero-padded cols
        tn_out = min(_round_up(out_dim, 128), max_tile_out)
        out_pad = _round_up(out_dim, tn_out)
        wt = jnp.pad(w.T.astype(compute_dtype),
                     ((0, in_cur - in_dim), (0, out_pad - out_dim)))
        bt = jnp.pad(b.reshape(1, -1).astype(jnp.float32),
                     ((0, 0), (0, out_pad - out_dim)))

        y = pl.pallas_call(
            functools.partial(_linear_kernel, apply_act=(li > 0),
                              neg_slope=neg_slope, compute_dtype=compute_dtype),
            out_shape=jax.ShapeDtypeStruct((n_pad, out_pad), jnp.float32),
            grid=(n_pad // tile_n, out_pad // tn_out),
            in_specs=[pl.BlockSpec((tile_n, in_cur), lambda i, j: (i, 0)),
                      pl.BlockSpec((in_cur, tn_out), lambda i, j: (0, j)),
                      pl.BlockSpec((1, tn_out), lambda i, j: (0, j))],
            out_specs=pl.BlockSpec((tile_n, tn_out), lambda i, j: (i, j)),
            compiler_params=pltpu.CompilerParams(
                dimension_semantics=("parallel", "parallel")),
        )(y, wt, bt)

    return y[:n, :params[-1][0].shape[0]]


def mlp_forward_pallas(x, params, neg_slope=0.2, *,
                       max_tile_n=512,
                       vmem_budget_bytes=48 << 20,
                       allow_bf16=True):
    """Fused Pallas MLP forward. `params` = list of torch-layout (W(out,in), b(out,)).

    Uses a single fused pallas_call with all weights VMEM-resident when they fit
    the VMEM budget; otherwise falls back to per-layer N-tiled pallas_calls.
    """
    n, in_dim = x.shape
    num_layers = len(params)
    out_dim = params[-1][0].shape[0]

    # bf16 inputs (with f32 MXU accumulation) only pay off at wide layers;
    # tiny widths stay f32 to hold tight tolerances (kernel is overhead-bound there).
    max_width = max(max(w.shape) for w, _ in params)
    compute_dtype = jnp.bfloat16 if (allow_bf16 and max_width >= 512) else jnp.float32
    w_bytes = 2 if compute_dtype == jnp.bfloat16 else 4

    # Lane-dense (128-multiple) store only when padding inflates HBM writeback
    # by <= 2x; tiny out_dim keeps natural width (masked vst beats 16x traffic on v5e).
    out_store = _round_up(out_dim, 128)
    if out_store > 2 * out_dim:
        out_store = out_dim

    # --- batch tile selection (multiple of 8, VMEM-budget derived) -------------
    max_tile_n = max(8, (max_tile_n // 8) * 8)
    tile_n = min(_round_up(n, 8), max_tile_n)
    if n > 8:
        # Guarantee >= 2 grid steps so the "parallel" axis feeds both v7x TCs.
        tile_n = min(tile_n, _round_up(pl.cdiv(n, 2), 8))
    while tile_n > 8 and _fused_vmem_bytes(tile_n, in_dim, out_store,
                                           params, w_bytes) > vmem_budget_bytes:
        tile_n = max(8, ((tile_n // 2) // 8) * 8)

    est = _fused_vmem_bytes(tile_n, in_dim, out_store, params, w_bytes)
    if est > vmem_budget_bytes:
        # All-weights-resident doesn't fit (e.g. 2048-4096 hidden on v7x's 64 MiB):
        # per-layer path, tiled over batch and output features.
        return _mlp_forward_layered(x, params, neg_slope, compute_dtype)

    n_pad = _round_up(n, tile_n)
    if n_pad != n:
        x = jnp.pad(x, ((0, n_pad - n), (0, 0)))

    # Pre-transpose weights to (in, out) once; biases become (1, out) rows.
    flat_wb = []
    in_specs = [pl.BlockSpec((tile_n, in_dim), lambda i: (i, 0))]
    flops = 0
    bytes_accessed = n_pad * in_dim * 4 + n_pad * out_store * 4
    for li, (w, b) in enumerate(params):
        wt = w.T.astype(compute_dtype)                 # (in, out)
        bt = b.reshape(1, -1).astype(jnp.float32)      # (1, out)
        if li == num_layers - 1 and out_store != out_dim:
            wt = jnp.pad(wt, ((0, 0), (0, out_store - out_dim)))
            bt = jnp.pad(bt, ((0, 0), (0, out_store - out_dim)))
        flat_wb += [wt, bt]
        # Grid-invariant, single-buffered: DMA'd once, resident across all batch tiles.
        in_specs.append(pl.BlockSpec(wt.shape, lambda i: (0, 0), **_INVARIANT_KW))
        in_specs.append(pl.BlockSpec(bt.shape, lambda i: (0, 0), **_INVARIANT_KW))
        flops += 2 * n_pad * wt.shape[0] * wt.shape[1]
        bytes_accessed += int(wt.size) * w_bytes + int(bt.size) * 4

    kernel = functools.partial(_mlp_fused_kernel, num_layers=num_layers,
                               neg_slope=neg_slope, compute_dtype=compute_dtype)

    out = pl.pallas_call(
        kernel,
        out_shape=jax.ShapeDtypeStruct((n_pad, out_store), jnp.float32),
        grid=(n_pad // tile_n,),
        in_specs=in_specs,
        out_specs=pl.BlockSpec((tile_n, out_store), lambda i: (i, 0)),
        compiler_params=pltpu.CompilerParams(
            # Batch tiles are independent -> shard across v7x's two TensorCores.
            dimension_semantics=("parallel",),
            vmem_limit_bytes=int(max(32 << 20, min(60 << 20, est * 3 // 2 + (4 << 20)))),
        ),
        cost_estimate=pl.CostEstimate(flops=int(flops), transcendentals=0,
                                      bytes_accessed=int(bytes_accessed)),
    )(x, *flat_wb)

    return out[:n, :out_dim]


def init_mlp_params(key, input_size, hidden_size, output_size, n_layers):
    """Deterministic synthetic init; same layer shapes as the torch module."""
    dims = [input_size] + [hidden_size] * (n_layers + 1) + [output_size]
    params = []
    for i in range(len(dims) - 1):
        fan_in, fan_out = dims[i], dims[i + 1]
        key, kw, kb = jax.random.split(key, 3)
        bound = 1.0 / jnp.sqrt(fan_in)
        w = jax.random.uniform(kw, (fan_out, fan_in), jnp.float32, -bound, bound)
        b = jax.random.uniform(kb, (fan_out,), jnp.float32, -bound, bound)
        params.append((w, b))
    return params


def mlp_forward_ref(x, params, neg_slope=0.2):
    """Plain-JAX reference mirroring torch semantics (Linear, then (LeakyReLU, Linear)*)."""
    y = x
    for i, (w, b) in enumerate(params):
        if i > 0:
            y = jnp.where(y >= 0, y, y * neg_slope)
        y = y @ w.T + b
    return y


if __name__ == "__main__":
    # Small shapes consistent with the module: MLP(input=16, hidden=32, output=8, n_layers=2)
    batch = 8
    input_size, hidden_size, output_size, n_layers = 16, 32, 8, 2

    key = jax.random.PRNGKey(0)
    key, kx = jax.random.split(key)
    x = jax.random.normal(kx, (batch, input_size), dtype=jnp.float32)
    params = init_mlp_params(key, input_size, hidden_size, output_size, n_layers)

    ref = mlp_forward_ref(x, params)

    # Fused (all-weights-resident) path.
    out = jax.block_until_ready(mlp_forward_pallas(x, params))
    assert out.shape == (batch, output_size)
    assert jnp.allclose(out, ref, atol=1e-5, rtol=1e-5), "fused path mismatch vs reference"

    # Exercise the VMEM-budget fallback (per-layer N-tiled) path as well.
    out_fb = jax.block_until_ready(mlp_forward_pallas(x, params, vmem_budget_bytes=1))
    assert jnp.allclose(out_fb, ref, atol=1e-5, rtol=1e-5), "fallback path mismatch vs reference"

    print("KERNEL_OK")
</pallas_src>

<mosaic_0001>
module attributes {stable_mosaic.version = 11 : i64} {
  func.func @_mlp_fused_kernel(%arg0: i32, %arg1: memref<8x16xf32, #tpu.memory_space<vmem>>, %arg2: memref<16x32xf32, #tpu.memory_space<vmem>>, %arg3: memref<1x32xf32, #tpu.memory_space<vmem>>, %arg4: memref<32x32xf32, #tpu.memory_space<vmem>>, %arg5: memref<1x32xf32, #tpu.memory_space<vmem>>, %arg6: memref<32x32xf32, #tpu.memory_space<vmem>>, %arg7: memref<1x32xf32, #tpu.memory_space<vmem>>, %arg8: memref<32x8xf32, #tpu.memory_space<vmem>>, %arg9: memref<1x8xf32, #tpu.memory_space<vmem>>, %arg10: memref<8x8xf32, #tpu.memory_space<vmem>>) attributes {dimension_semantics = [#tpu.dimension_semantics<parallel>], iteration_bounds = array<i64: 1>, scalar_prefetch = 0 : i64, scratch_operands = 0 : i64, tpu.core_type = #tpu.core_type<tc>, window_params = [{transform_indices = @transform_0, window_bounds = array<i64: 8, 16>}, {pipeline_mode = #tpu.pipeline_mode<synchronous>, transform_indices = @transform_1, window_bounds = array<i64: 16, 32>}, {pipeline_mode = #tpu.pipeline_mode<synchronous>, transform_indices = @transform_2, window_bounds = array<i64: 1, 32>}, {pipeline_mode = #tpu.pipeline_mode<synchronous>, transform_indices = @transform_3, window_bounds = array<i64: 32, 32>}, {pipeline_mode = #tpu.pipeline_mode<synchronous>, transform_indices = @transform_4, window_bounds = array<i64: 1, 32>}, {pipeline_mode = #tpu.pipeline_mode<synchronous>, transform_indices = @transform_5, window_bounds = array<i64: 32, 32>}, {pipeline_mode = #tpu.pipeline_mode<synchronous>, transform_indices = @transform_6, window_bounds = array<i64: 1, 32>}, {pipeline_mode = #tpu.pipeline_mode<synchronous>, transform_indices = @transform_7, window_bounds = array<i64: 32, 8>}, {pipeline_mode = #tpu.pipeline_mode<synchronous>, transform_indices = @transform_8, window_bounds = array<i64: 1, 8>}, {transform_indices = @transform_9, window_bounds = array<i64: 8, 8>}]} {
    %c0 = arith.constant 0 : index
    %c0_0 = arith.constant 0 : index
    %0 = vector.load %arg1[%c0, %c0_0] : memref<8x16xf32, #tpu.memory_space<vmem>>, vector<8x16xf32>
    %c0_1 = arith.constant 0 : index
    %c0_2 = arith.constant 0 : index
    %1 = vector.load %arg2[%c0_1, %c0_2] : memref<16x32xf32, #tpu.memory_space<vmem>>, vector<16x32xf32>
    %cst = arith.constant dense<0.000000e+00> : vector<8x32xf32>
    %2 = tpu.matmul %0, %1, %cst {dimension_numbers = #tpu.dot_dimension_numbers<[1], [0], [0], [1], [0, 0, 1, 1], [], []>} : vector<8x16xf32>, vector<16x32xf32>, vector<8x32xf32> -> vector<8x32xf32>
    %c0_3 = arith.constant 0 : index
    %c0_4 = arith.constant 0 : index
    %3 = vector.load %arg3[%c0_3, %c0_4] : memref<1x32xf32, #tpu.memory_space<vmem>>, vector<1x32xf32>
    %4 = vector.broadcast %3 : vector<1x32xf32> to vector<8x32xf32>
    %5 = arith.addf %2, %4 : vector<8x32xf32>
    %cst_5 = arith.constant 2.000000e-01 : f32
    %6 = vector.broadcast %cst_5 : f32 to vector<8x32xf32>
    %7 = arith.mulf %5, %6 : vector<8x32xf32>
    %8 = arith.maximumf %5, %7 : vector<8x32xf32>
    %c0_6 = arith.constant 0 : index
    %c0_7 = arith.constant 0 : index
    %9 = vector.load %arg4[%c0_6, %c0_7] : memref<32x32xf32, #tpu.memory_space<vmem>>, vector<32x32xf32>
    %cst_8 = arith.constant dense<0.000000e+00> : vector<8x32xf32>
    %10 = tpu.matmul %8, %9, %cst_8 {dimension_numbers = #tpu.dot_dimension_numbers<[1], [0], [0], [1], [0, 0, 1, 1], [], []>} : vector<8x32xf32>, vector<32x32xf32>, vector<8x32xf32> -> vector<8x32xf32>
    %c0_9 = arith.constant 0 : index
    %c0_10 = arith.constant 0 : index
    %11 = vector.load %arg5[%c0_9, %c0_10] : memref<1x32xf32, #tpu.memory_space<vmem>>, vector<1x32xf32>
    %12 = vector.broadcast %11 : vector<1x32xf32> to vector<8x32xf32>
    %13 = arith.addf %10, %12 : vector<8x32xf32>
    %cst_11 = arith.constant 2.000000e-01 : f32
    %14 = vector.broadcast %cst_11 : f32 to vector<8x32xf32>
    %15 = arith.mulf %13, %14 : vector<8x32xf32>
    %16 = arith.maximumf %13, %15 : vector<8x32xf32>
    %c0_12 = arith.constant 0 : index
    %c0_13 = arith.constant 0 : index
    %17 = vector.load %arg6[%c0_12, %c0_13] : memref<32x32xf32, #tpu.memory_space<vmem>>, vector<32x32xf32>
    %cst_14 = arith.constant dense<0.000000e+00> : vector<8x32xf32>
    %18 = tpu.matmul %16, %17, %cst_14 {dimension_numbers = #tpu.dot_dimension_numbers<[1], [0], [0], [1], [0, 0, 1, 1], [], []>} : vector<8x32xf32>, vector<32x32xf32>, vector<8x32xf32> -> vector<8x32xf32>
    %c0_15 = arith.constant 0 : index
    %c0_16 = arith.constant 0 : index
    %19 = vector.load %arg7[%c0_15, %c0_16] : memref<1x32xf32, #tpu.memory_space<vmem>>, vector<1x32xf32>
    %20 = vector.broadcast %19 : vector<1x32xf32> to vector<8x32xf32>
    %21 = arith.addf %18, %20 : vector<8x32xf32>
    %cst_17 = arith.constant 2.000000e-01 : f32
    %22 = vector.broadcast %cst_17 : f32 to vector<8x32xf32>
    %23 = arith.mulf %21, %22 : vector<8x32xf32>
    %24 = arith.maximumf %21, %23 : vector<8x32xf32>
    %c0_18 = arith.constant 0 : index
    %c0_19 = arith.constant 0 : index
    %25 = vector.load %arg8[%c0_18, %c0_19] : memref<32x8xf32, #tpu.memory_space<vmem>>, vector<32x8xf32>
    %cst_20 = arith.constant dense<0.000000e+00> : vector<8x8xf32>
    %26 = tpu.matmul %24, %25, %cst_20 {dimension_numbers = #tpu.dot_dimension_numbers<[1], [0], [0], [1], [0, 0, 1, 1], [], []>} : vector<8x32xf32>, vector<32x8xf32>, vector<8x8xf32> -> vector<8x8xf32>
    %c0_21 = arith.constant 0 : index
    %c0_22 = arith.constant 0 : index
    %27 = vector.load %arg9[%c0_21, %c0_22] : memref<1x8xf32, #tpu.memory_space<vmem>>, vector<1x8xf32>
    %28 = vector.broadcast %27 : vector<1x8xf32> to vector<8x8xf32>
    %29 = arith.addf %26, %28 : vector<8x8xf32>
    %c0_23 = arith.constant 0 : index
    %c0_24 = arith.constant 0 : index
    %30 = vector.load %arg10[%c0_23, %c0_24] : memref<8x8xf32, #tpu.memory_space<vmem>>, vector<8x8xf32>
    tpu.vector_store %arg10[%c0_23, %c0_24], %29 {strides = array<i32>} : memref<8x8xf32, #tpu.memory_space<vmem>>, vector<8x8xf32>,
    return
  }
  func.func @transform_0(%arg0: i32) -> (i32, i32) {
    %c0_i32 = arith.constant 0 : i32
    %c0_i32_0 = arith.constant 0 : i32
    return %arg0, %c0_i32 : i32, i32
  }
  func.func @transform_1(%arg0: i32) -> (i32, i32) {
    %c0_i32 = arith.constant 0 : i32
    %c0_i32_0 = arith.constant 0 : i32
    %c0_i32_1 = arith.constant 0 : i32
    return %c0_i32, %c0_i32_0 : i32, i32
  }
  func.func @transform_2(%arg0: i32) -> (i32, i32) {
    %c0_i32 = arith.constant 0 : i32
    %c0_i32_0 = arith.constant 0 : i32
    %c0_i32_1 = arith.constant 0 : i32
    return %c0_i32, %c0_i32_0 : i32, i32
  }
  func.func @transform_3(%arg0: i32) -> (i32, i32) {
    %c0_i32 = arith.constant 0 : i32
    %c0_i32_0 = arith.constant 0 : i32
    %c0_i32_1 = arith.constant 0 : i32
    return %c0_i32, %c0_i32_0 : i32, i32
  }
  func.func @transform_4(%arg0: i32) -> (i32, i32) {
    %c0_i32 = arith.constant 0 : i32
    %c0_i32_0 = arith.constant 0 : i32
    %c0_i32_1 = arith.constant 0 : i32
    return %c0_i32, %c0_i32_0 : i32, i32
  }
  func.func @transform_5(%arg0: i32) -> (i32, i32) {
    %c0_i32 = arith.constant 0 : i32
    %c0_i32_0 = arith.constant 0 : i32
    %c0_i32_1 = arith.constant 0 : i32
    return %c0_i32, %c0_i32_0 : i32, i32
  }
  func.func @transform_6(%arg0: i32) -> (i32, i32) {
    %c0_i32 = arith.constant 0 : i32
    %c0_i32_0 = arith.constant 0 : i32
    %c0_i32_1 = arith.constant 0 : i32
    return %c0_i32, %c0_i32_0 : i32, i32
  }
  func.func @transform_7(%arg0: i32) -> (i32, i32) {
    %c0_i32 = arith.constant 0 : i32
    %c0_i32_0 = arith.constant 0 : i32
    %c0_i32_1 = arith.constant 0 : i32
    return %c0_i32, %c0_i32_0 : i32, i32
  }
  func.func @transform_8(%arg0: i32) -> (i32, i32) {
    %c0_i32 = arith.constant 0 : i32
    %c0_i32_0 = arith.constant 0 : i32
    %c0_i32_1 = arith.constant 0 : i32
    return %c0_i32, %c0_i32_0 : i32, i32
  }
  func.func @transform_9(%arg0: i32) -> (i32, i32) {
    %c0_i32 = arith.constant 0 : i32
    %c0_i32_0 = arith.constant 0 : i32
    return %arg0, %c0_i32 : i32, i32
  }
}

</mosaic_0001>

<llo_original>
// kernel: tpu_custom_call.1
$region0: #{tpu_custom_call.1}
  #allocation0 [shape = 'u32[]', space=smem, size = 0x4, offset = 0x4, fixed_abs, tag = 'smem constant byte address 0x4 - core index']
  #allocation1 [shape = 'u32[144,128]{1,0:T(1,128)}', space=vmem, size = 0x12000, scoped, tag = 'internal scratch']
  %s0 = inlined_call_operand.hbm [shape: f32[8,16], index: 0, kind: input, shape index: {}]
  %s1 = inlined_call_operand.vmem [shape: f32[16,32], index: 1, kind: input, shape index: {}]
  %s2 = inlined_call_operand.vmem [shape: f32[1,32], index: 2, kind: input, shape index: {}]
  %s3 = inlined_call_operand.vmem [shape: f32[32,32], index: 3, kind: input, shape index: {}]
  %s4 = inlined_call_operand.vmem [shape: f32[1,32], index: 4, kind: input, shape index: {}]
  %s5 = inlined_call_operand.hbm [shape: f32[32,32], index: 5, kind: input, shape index: {}]
  %s6 = inlined_call_operand.vmem [shape: f32[1,32], index: 6, kind: input, shape index: {}]
  %s7 = inlined_call_operand.vmem [shape: f32[32,8], index: 7, kind: input, shape index: {}]
  %s8 = inlined_call_operand.vmem [shape: f32[1,8], index: 8, kind: input, shape index: {}]
  %s9 = inlined_call_operand.hbm [shape: f32[8,8], index: 9, kind: output, shape index: {}]
  %s10 = sld [smem:[#allocation0]]
  $region54: #{tpu_custom_call.1} parent=0
    _
  %s12 = ssub.s32 1, %s10
  %s13 = scalar_select 0, %s12, %s10
  $region1: #{tpu_custom_call.1} parent=0
    #allocation2 [shape = 'u8[4096]{0}', space=vmem, size = 0x1000, scoped, tag = 'input window, operand 0, single buffered']
    #allocation3 [shape = 's32[1]{0}', space=sflag, size = 0x4, scoped, tag = 'scoped memory for tpu_custom_call.1']
    #allocation4 [shape = 's32[1]{0}', space=sflag, size = 0x4, scoped, tag = 'scoped memory for tpu_custom_call.1']
    #allocation5 [shape = 'u8[16384]{0}', space=vmem, size = 0x4000, scoped, tag = 'input window, operand 5, single buffered']
    #allocation6 [shape = 's32[1]{0}', space=sflag, size = 0x4, scoped, tag = 'scoped memory for tpu_custom_call.1']
    #allocation7 [shape = 'u8[4096]{0}', space=vmem, size = 0x1000, scoped, tag = 'output window, operand 0, single buffered']
    %14 = vsyncpa [#allocation3], 0
    %15 = vsyncpa [#allocation6], 0
    %16 = vsyncpa [#allocation4], 0
    // Predicated region
    $region2: #{tpu_custom_call.1} parent=1 // pred_check
      _
    $region3: #{tpu_custom_call.1} parent=1 // pred_check_branch
      %18 = sbr.rel (0) target = $region5
    $region4: #{tpu_custom_call.1} parent=1 // pred_region
      %s20 = ssub.s32 128, 128
      %21 = vsyncadd [#allocation3], %s20
      %s23 = sshll.u32 [#allocation2], 4
      %s24 = int_to_ptr.vmem [resolvable:$true] %s23
      %26 = dma.hbm_to_vmem [thread:$0]  %s0, 128, %s24, [#allocation3]
    $region5: #{tpu_custom_call.1} parent=1 // pred_fallthru
      _
    // Predicated region
    $region6: #{tpu_custom_call.1} parent=1 // pred_check
      _
    $region7: #{tpu_custom_call.1} parent=1 // pred_check_branch
      %28 = sbr.rel (0) target = $region9
    $region8: #{tpu_custom_call.1} parent=1 // pred_region
      _
    $region9: #{tpu_custom_call.1} parent=1 // pred_fallthru
      _
    // Predicated region
    $region10: #{tpu_custom_call.1} parent=1 // pred_check
      _
    $region11: #{tpu_custom_call.1} parent=1 // pred_check_branch
      %30 = sbr.rel (0) target = $region13
    $region12: #{tpu_custom_call.1} parent=1 // pred_region
      _
    $region13: #{tpu_custom_call.1} parent=1 // pred_fallthru
      _
    // Predicated region
    $region14: #{tpu_custom_call.1} parent=1 // pred_check
      _
    $region15: #{tpu_custom_call.1} parent=1 // pred_check_branch
      %32 = sbr.rel (0) target = $region17
    $region16: #{tpu_custom_call.1} parent=1 // pred_region
      _
    $region17: #{tpu_custom_call.1} parent=1 // pred_fallthru
      _
    // Predicated region
    $region18: #{tpu_custom_call.1} parent=1 // pred_check
      _
    $region19: #{tpu_custom_call.1} parent=1 // pred_check_branch
      %34 = sbr.rel (0) target = $region21
    $region20: #{tpu_custom_call.1} parent=1 // pred_region
      _
    $region21: #{tpu_custom_call.1} parent=1 // pred_fallthru
      _
    // Predicated region
    $region22: #{tpu_custom_call.1} parent=1 // pred_check
      _
    $region23: #{tpu_custom_call.1} parent=1 // pred_check_branch
      %36 = sbr.rel (0) target = $region25
    $region24: #{tpu_custom_call.1} parent=1 // pred_region
      %s38 = ssub.s32 512, 512
      %39 = vsyncadd [#allocation6], %s38
      %s40 = sshll.u32 [#allocation5], 4
      %s41 = int_to_ptr.vmem [resolvable:$true] %s40
      %46 = dma.hbm_to_vmem [thread:$0]  %s5, 512, %s41, [#allocation6], 128, 128, 8
    $region25: #{tpu_custom_call.1} parent=1 // pred_fallthru
      _
    // Predicated region
    $region26: #{tpu_custom_call.1} parent=1 // pred_check
      _
    $region27: #{tpu_custom_call.1} parent=1 // pred_check_branch
      %48 = sbr.rel (0) target = $region29
    $region28: #{tpu_custom_call.1} parent=1 // pred_region
      _
    $region29: #{tpu_custom_call.1} parent=1 // pred_fallthru
      _
    // Predicated region
    $region30: #{tpu_custom_call.1} parent=1 // pred_check
      _
    $region31: #{tpu_custom_call.1} parent=1 // pred_check_branch
      %50 = sbr.rel (0) target = $region33
    $region32: #{tpu_custom_call.1} parent=1 // pred_region
      _
    $region33: #{tpu_custom_call.1} parent=1 // pred_fallthru
      _
    // Predicated region
    $region34: #{tpu_custom_call.1} parent=1 // pred_check
      _
    $region35: #{tpu_custom_call.1} parent=1 // pred_check_branch
      %52 = sbr.rel (0) target = $region37
    $region36: #{tpu_custom_call.1} parent=1 // pred_region
      _
    $region37: #{tpu_custom_call.1} parent=1 // pred_fallthru
      _
    // Predicated region
    $region38: #{tpu_custom_call.1} parent=1 // pred_check
      _
    $region39: #{tpu_custom_call.1} parent=1 // pred_check_branch
      %54 = sbr.rel (0) target = $region41
    $region40: #{tpu_custom_call.1} parent=1 // pred_region
      %55 = dma.done [#allocation3], 128
    $region41: #{tpu_custom_call.1} parent=1 // pred_fallthru
      _
    // Predicated region
    $region42: #{tpu_custom_call.1} parent=1 // pred_check
      _
    $region43: #{tpu_custom_call.1} parent=1 // pred_check_branch
      %57 = sbr.rel (0) target = $region45
    $region44: #{tpu_custom_call.1} parent=1 // pred_region
      %58 = dma.done [#allocation6], 512
    $region45: #{tpu_custom_call.1} parent=1 // pred_fallthru
      _
    %v59 = vld [vmem:[#allocation2] sm:$0xff]
    %v60 = vld [vmem:[%s1] sm:$0xff]
    %v61 = vld [vmem:[%s1 + $0x8] sm:$0xff]
    %v62 = vld [vmem:[%s2] sm:$0x1]
    %v64 = vlaneseq
    %v65 = vshrl.u32 %v64, 7
    %v66 = vsub.s32 0, %v65
    %v67 = vrot.slane %v62, %v66
    %vm69 = vcmask 130048
    %v71 = vsel %vm69, %v59, 0
    %73 = vmatprep.subr.mxu0 0.0
    %74 = vmatpush1.msra.mxu0 %v60
    %75 = vmatprep.subr.mxu0 0.0
    %76 = vmatpush1.msra.mxu0 %v61
    %77 = vmatprep.subr.mxu0 0.0
    %78 = vmatpush1.msra.mxu0 0.0
    %79 = vmatprep.subr.mxu0 0.0
    %80 = vmatpush1.msra.mxu0 0.0
    %81 = vmatprep.subr.mxu0 0.0
    %82 = vmatpush1.msra.mxu0 0.0
    %83 = vmatprep.subr.mxu0 0.0
    %84 = vmatpush1.msra.mxu0 0.0
    %85 = vmatprep.subr.mxu0 0.0
    %86 = vmatpush1.msra.mxu0 0.0
    %87 = vmatprep.subr.mxu0 0.0
    %88 = vmatpush1.msra.mxu0 0.0
    %89 = vmatprep.subr.mxu0 0.0
    %90 = vmatpush1.msra.mxu0 0.0
    %91 = vmatprep.subr.mxu0 0.0
    %92 = vmatpush1.msra.mxu0 0.0
    %93 = vmatprep.subr.mxu0 0.0
    %94 = vmatpush1.msra.mxu0 0.0
    %95 = vmatprep.subr.mxu0 0.0
    %96 = vmatpush1.msra.mxu0 0.0
    %97 = vmatprep.subr.mxu0 0.0
    %98 = vmatpush1.msra.mxu0 0.0
    %99 = vmatprep.subr.mxu0 0.0
    %100 = vmatpush1.msra.mxu0 0.0
    %101 = vmatprep.subr.mxu0 0.0
    %102 = vmatpush1.msra.mxu0 0.0
    %103 = vmatprep.subr.mxu0 0.0
    %104 = vmatpush1.msra.mxu0 0.0
    %105 = vmatprep.subr.mxu0 0.0
    %106 = vmatpush1.msra.mxu0 0.0
    %107 = vmatprep.subr.mxu0 0.0
    %108 = vmatpush1.msra.mxu0 0.0
    %109 = vmatprep.subr.mxu0 0.0
    %110 = vmatpush1.msra.mxu0 0.0
    %111 = vmatprep.subr.mxu0 0.0
    %112 = vmatpush1.msra.mxu0 0.0
    %113 = vmatprep.subr.mxu0 0.0
    %114 = vmatpush1.msra.mxu0 0.0
    %115 = vmatprep.subr.mxu0 0.0
    %116 = vmatpush1.msra.mxu0 0.0
    %117 = vmatprep.subr.mxu0 0.0
    %118 = vmatpush1.msra.mxu0 0.0
    %119 = vmatprep.subr.mxu0 0.0
    %120 = vmatpush1.msra.mxu0 0.0
    %121 = vmatprep.subr.mxu0 0.0
    %122 = vmatpush1.msra.mxu0 0.0
    %123 = vmatprep.subr.mxu0 0.0
    %124 = vmatpush1.msra.mxu0 0.0
    %125 = vmatprep.subr.mxu0 0.0
    %126 = vmatpush1.msra.mxu0 0.0
    %127 = vmatprep.subr.mxu0 0.0
    %128 = vmatpush1.msra.mxu0 0.0
    %129 = vmatprep.subr.mxu0 0.0
    %130 = vmatpush1.msra.mxu0 0.0
    %131 = vmatprep.subr.mxu0 0.0
    %132 = vmatpush1.msra.mxu0 0.0
    %133 = vmatprep.subr.mxu0 0.0
    %134 = vmatpush1.msra.mxu0 0.0
    %135 = vmatprep.subr.mxu0 0.0
    %136 = vmatpush1.msra.mxu0 0.0
    %137 = vmatprep.mubr.f32.mxu0 0.0
    %138 = vmatmul.mubr.f32.gmra.mrb[0].mxu0 %v71
    %v139 = vpop.f32.mrb[0].mxu0
    %v140 = vadd.f32 %v67, %v139
    %v141 = vpop.f32.mrb[0].mxu0
    %142 = vdwg.mxu0
    %v143 = vmul.f32 %v140, 0.2
    %v144 = vmax.f32 %v140, %v143
    %v145 = vld [vmem:[%s3] sm:$0xff]
    %v146 = vld [vmem:[%s3 + $0x8] sm:$0xff]
    %v147 = vld [vmem:[%s3 + $0x10] sm:$0xff]
    %v148 = vld [vmem:[%s3 + $0x18] sm:$0xff]
    %v149 = vld [vmem:[%s4] sm:$0x1]
    %v151 = vlaneseq
    %v152 = vshrl.u32 %v151, 7
    %v153 = vsub.s32 0, %v152
    %v154 = vrot.slane %v149, %v153
    %vm156 = vcmask 261120
    %v158 = vsel %vm156, %v144, 0
    %160 = vmatprep.subr.mxu0 0.0
    %161 = vmatpush1.msra.mxu0 %v145
    %162 = vmatprep.subr.mxu0 0.0
    %163 = vmatpush1.msra.mxu0 %v146
    %164 = vmatprep.subr.mxu0 0.0
    %165 = vmatpush1.msra.mxu0 %v147
    %166 = vmatprep.subr.mxu0 0.0
    %167 = vmatpush1.msra.mxu0 %v148
    %168 = vmatprep.subr.mxu0 0.0
    %169 = vmatpush1.msra.mxu0 0.0
    %170 = vmatprep.subr.mxu0 0.0
    %171 = vmatpush1.msra.mxu0 0.0
    %172 = vmatprep.subr.mxu0 0.0
    %173 = vmatpush1.msra.mxu0 0.0
    %174 = vmatprep.subr.mxu0 0.0
    %175 = vmatpush1.msra.mxu0 0.0
    %176 = vmatprep.subr.mxu0 0.0
    %177 = vmatpush1.msra.mxu0 0.0
    %178 = vmatprep.subr.mxu0 0.0
    %179 = vmatpush1.msra.mxu0 0.0
    %180 = vmatprep.subr.mxu0 0.0
    %181 = vmatpush1.msra.mxu0 0.0
    %182 = vmatprep.subr.mxu0 0.0
    %183 = vmatpush1.msra.mxu0 0.0
    %184 = vmatprep.subr.mxu0 0.0
    %185 = vmatpush1.msra.mxu0 0.0
    %186 = vmatprep.subr.mxu0 0.0
    %187 = vmatpush1.msra.mxu0 0.0
    %188 = vmatprep.subr.mxu0 0.0
    %189 = vmatpush1.msra.mxu0 0.0
    %190 = vmatprep.subr.mxu0 0.0
    %191 = vmatpush1.msra.mxu0 0.0
    %192 = vmatprep.subr.mxu0 0.0
    %193 = vmatpush1.msra.mxu0 0.0
    %194 = vmatprep.subr.mxu0 0.0
    %195 = vmatpush1.msra.mxu0 0.0
    %196 = vmatprep.subr.mxu0 0.0
    %197 = vmatpush1.msra.mxu0 0.0
    %198 = vmatprep.subr.mxu0 0.0
    %199 = vmatpush1.msra.mxu0 0.0
    %200 = vmatprep.subr.mxu0 0.0
    %201 = vmatpush1.msra.mxu0 0.0
    %202 = vmatprep.subr.mxu0 0.0
    %203 = vmatpush1.msra.mxu0 0.0
    %204 = vmatprep.subr.mxu0 0.0
    %205 = vmatpush1.msra.mxu0 0.0
    %206 = vmatprep.subr.mxu0 0.0
    %207 = vmatpush1.msra.mxu0 0.0
    %208 = vmatprep.subr.mxu0 0.0
    %209 = vmatpush1.msra.mxu0 0.0
    %210 = vmatprep.subr.mxu0 0.0
    %211 = vmatpush1.msra.mxu0 0.0
    %212 = vmatprep.subr.mxu0 0.0
    %213 = vmatpush1.msra.mxu0 0.0
    %214 = vmatprep.subr.mxu0 0.0
    %215 = vmatpush1.msra.mxu0 0.0
    %216 = vmatprep.subr.mxu0 0.0
    %217 = vmatpush1.msra.mxu0 0.0
    %218 = vmatprep.subr.mxu0 0.0
    %219 = vmatpush1.msra.mxu0 0.0
    %220 = vmatprep.subr.mxu0 0.0
    %221 = vmatpush1.msra.mxu0 0.0
    %222 = vmatprep.subr.mxu0 0.0
    %223 = vmatpush1.msra.mxu0 0.0
    %224 = vmatprep.mubr.f32.mxu0 0.0
    %225 = vmatmul.mubr.f32.gmra.mrb[0].mxu0 %v158
    %v226 = vpop.f32.mrb[0].mxu0
    %v227 = vadd.f32 %v154, %v226
    %v228 = vpop.f32.mrb[0].mxu0
    %229 = vdwg.mxu0
    %v230 = vmul.f32 %v227, 0.2
    %v231 = vmax.f32 %v227, %v230
    %v232 = vld [vmem:[#allocation5] sm:$0xff]
    %v233 = vld [vmem:[#allocation5 + $0x8] sm:$0xff]
    %v234 = vld [vmem:[#allocation5 + $0x10] sm:$0xff]
    %v235 = vld [vmem:[#allocation5 + $0x18] sm:$0xff]
    %v236 = vld [vmem:[%s6] sm:$0x1]
    %v238 = vlaneseq
    %v239 = vshrl.u32 %v238, 7
    %v240 = vsub.s32 0, %v239
    %v241 = vrot.slane %v236, %v240
    %v244 = vsel %vm156, %v231, 0
    %246 = vmatprep.subr.mxu0 0.0
    %247 = vmatpush1.msra.mxu0 %v232
    %248 = vmatprep.subr.mxu0 0.0
    %249 = vmatpush1.msra.mxu0 %v233
    %250 = vmatprep.subr.mxu0 0.0
    %251 = vmatpush1.msra.mxu0 %v234
    %252 = vmatprep.subr.mxu0 0.0
    %253 = vmatpush1.msra.mxu0 %v235
    %254 = vmatprep.subr.mxu0 0.0
    %255 = vmatpush1.msra.mxu0 0.0
    %256 = vmatprep.subr.mxu0 0.0
    %257 = vmatpush1.msra.mxu0 0.0
    %258 = vmatprep.subr.mxu0 0.0
    %259 = vmatpush1.msra.mxu0 0.0
    %260 = vmatprep.subr.mxu0 0.0
    %261 = vmatpush1.msra.mxu0 0.0
    %262 = vmatprep.subr.mxu0 0.0
    %263 = vmatpush1.msra.mxu0 0.0
    %264 = vmatprep.subr.mxu0 0.0
    %265 = vmatpush1.msra.mxu0 0.0
    %266 = vmatprep.subr.mxu0 0.0
    %267 = vmatpush1.msra.mxu0 0.0
    %268 = vmatprep.subr.mxu0 0.0
    %269 = vmatpush1.msra.mxu0 0.0
    %270 = vmatprep.subr.mxu0 0.0
    %271 = vmatpush1.msra.mxu0 0.0
    %272 = vmatprep.subr.mxu0 0.0
    %273 = vmatpush1.msra.mxu0 0.0
    %274 = vmatprep.subr.mxu0 0.0
    %275 = vmatpush1.msra.mxu0 0.0
    %276 = vmatprep.subr.mxu0 0.0
    %277 = vmatpush1.msra.mxu0 0.0
    %278 = vmatprep.subr.mxu0 0.0
    %279 = vmatpush1.msra.mxu0 0.0
    %280 = vmatprep.subr.mxu0 0.0
    %281 = vmatpush1.msra.mxu0 0.0
    %282 = vmatprep.subr.mxu0 0.0
    %283 = vmatpush1.msra.mxu0 0.0
    %284 = vmatprep.subr.mxu0 0.0
    %285 = vmatpush1.msra.mxu0 0.0
    %286 = vmatprep.subr.mxu0 0.0
    %287 = vmatpush1.msra.mxu0 0.0
    %288 = vmatprep.subr.mxu0 0.0
    %289 = vmatpush1.msra.mxu0 0.0
    %290 = vmatprep.subr.mxu0 0.0
    %291 = vmatpush1.msra.mxu0 0.0
    %292 = vmatprep.subr.mxu0 0.0
    %293 = vmatpush1.msra.mxu0 0.0
    %294 = vmatprep.subr.mxu0 0.0
    %295 = vmatpush1.msra.mxu0 0.0
    %296 = vmatprep.subr.mxu0 0.0
    %297 = vmatpush1.msra.mxu0 0.0
    %298 = vmatprep.subr.mxu0 0.0
    %299 = vmatpush1.msra.mxu0 0.0
    %300 = vmatprep.subr.mxu0 0.0
    %301 = vmatpush1.msra.mxu0 0.0
    %302 = vmatprep.subr.mxu0 0.0
    %303 = vmatpush1.msra.mxu0 0.0
    %304 = vmatprep.subr.mxu0 0.0
    %305 = vmatpush1.msra.mxu0 0.0
    %306 = vmatprep.subr.mxu0 0.0
    %307 = vmatpush1.msra.mxu0 0.0
    %308 = vmatprep.subr.mxu0 0.0
    %309 = vmatpush1.msra.mxu0 0.0
    %310 = vmatprep.mubr.f32.mxu0 0.0
    %311 = vmatmul.mubr.f32.gmra.mrb[0].mxu0 %v244
    %v312 = vpop.f32.mrb[0].mxu0
    %v313 = vadd.f32 %v241, %v312
    %v314 = vpop.f32.mrb[0].mxu0
    %315 = vdwg.mxu0
    %v316 = vmul.f32 %v313, 0.2
    %v317 = vmax.f32 %v313, %v316
    %v318 = vld [vmem:[%s7] sm:$0xff]
    %v319 = vld [vmem:[%s7 + $0x8] sm:$0xff]
    %v320 = vld [vmem:[%s7 + $0x10] sm:$0xff]
    %v321 = vld [vmem:[%s7 + $0x18] sm:$0xff]
    %v322 = vld [vmem:[%s8] sm:$0x1]
    %v324 = vlaneseq
    %v325 = vshrl.u32 %v324, 7
    %v326 = vsub.s32 0, %v325
    %v327 = vrot.slane %v322, %v326
    %v330 = vsel %vm156, %v317, 0
    %332 = vmatprep.subr.mxu0 0.0
    %333 = vmatpush1.msra.mxu0 %v318
    %334 = vmatprep.subr.mxu0 0.0
    %335 = vmatpush1.msra.mxu0 %v319
    %336 = vmatprep.subr.mxu0 0.0
    %337 = vmatpush1.msra.mxu0 %v320
    %338 = vmatprep.subr.mxu0 0.0
    %339 = vmatpush1.msra.mxu0 %v321
    %340 = vmatprep.subr.mxu0 0.0
    %341 = vmatpush1.msra.mxu0 0.0
    %342 = vmatprep.subr.mxu0 0.0
    %343 = vmatpush1.msra.mxu0 0.0
    %344 = vmatprep.subr.mxu0 0.0
    %345 = vmatpush1.msra.mxu0 0.0
    %346 = vmatprep.subr.mxu0 0.0
    %347 = vmatpush1.msra.mxu0 0.0
    %348 = vmatprep.subr.mxu0 0.0
    %349 = vmatpush1.msra.mxu0 0.0
    %350 = vmatprep.subr.mxu0 0.0
    %351 = vmatpush1.msra.mxu0 0.0
    %352 = vmatprep.subr.mxu0 0.0
    %353 = vmatpush1.msra.mxu0 0.0
    %354 = vmatprep.subr.mxu0 0.0
    %355 = vmatpush1.msra.mxu0 0.0
    %356 = vmatprep.subr.mxu0 0.0
    %357 = vmatpush1.msra.mxu0 0.0
    %358 = vmatprep.subr.mxu0 0.0
    %359 = vmatpush1.msra.mxu0 0.0
    %360 = vmatprep.subr.mxu0 0.0
    %361 = vmatpush1.msra.mxu0 0.0
    %362 = vmatprep.subr.mxu0 0.0
    %363 = vmatpush1.msra.mxu0 0.0
    %364 = vmatprep.subr.mxu0 0.0
    %365 = vmatpush1.msra.mxu0 0.0
    %366 = vmatprep.subr.mxu0 0.0
    %367 = vmatpush1.msra.mxu0 0.0
    %368 = vmatprep.subr.mxu0 0.0
    %369 = vmatpush1.msra.mxu0 0.0
    %370 = vmatprep.subr.mxu0 0.0
    %371 = vmatpush1.msra.mxu0 0.0
    %372 = vmatprep.subr.mxu0 0.0
    %373 = vmatpush1.msra.mxu0 0.0
    %374 = vmatprep.subr.mxu0 0.0
    %375 = vmatpush1.msra.mxu0 0.0
    %376 = vmatprep.subr.mxu0 0.0
    %377 = vmatpush1.msra.mxu0 0.0
    %378 = vmatprep.subr.mxu0 0.0
    %379 = vmatpush1.msra.mxu0 0.0
    %380 = vmatprep.subr.mxu0 0.0
    %381 = vmatpush1.msra.mxu0 0.0
    %382 = vmatprep.subr.mxu0 0.0
    %383 = vmatpush1.msra.mxu0 0.0
    %384 = vmatprep.subr.mxu0 0.0
    %385 = vmatpush1.msra.mxu0 0.0
    %386 = vmatprep.subr.mxu0 0.0
    %387 = vmatpush1.msra.mxu0 0.0
    %388 = vmatprep.subr.mxu0 0.0
    %389 = vmatpush1.msra.mxu0 0.0
    %390 = vmatprep.subr.mxu0 0.0
    %391 = vmatpush1.msra.mxu0 0.0
    %392 = vmatprep.subr.mxu0 0.0
    %393 = vmatpush1.msra.mxu0 0.0
    %394 = vmatprep.subr.mxu0 0.0
    %395 = vmatpush1.msra.mxu0 0.0
    %396 = vmatprep.mubr.f32.mxu0 0.0
    %397 = vmatmul.mubr.f32.gmra.mrb[0].mxu0 %v330
    %v398 = vpop.f32.mrb[0].mxu0
    %v399 = vadd.f32 %v327, %v398
    %v400 = vpop.f32.mrb[0].mxu0
    %401 = vdwg.mxu0
    %vm402 = vcmask 64512
    %403 = vst.msk [vmem:[#allocation7] sm:$0xff] %vm402, %v399
    // Predicated region
    $region46: #{tpu_custom_call.1} parent=1 // pred_check
      _
    $region47: #{tpu_custom_call.1} parent=1 // pred_check_branch
      %405 = sbr.rel (0) target = $region49
    $region48: #{tpu_custom_call.1} parent=1 // pred_region
      %s407 = ssub.s32 128, 128
      %408 = vsyncadd [#allocation4], %s407
      %s410 = sshll.u32 [#allocation7], 4
      %s411 = int_to_ptr.vmem [resolvable:$true] %s410
      %413 = dma.vmem_to_hbm [thread:$0]  %s411, 128, %s9, [#allocation4]
    $region49: #{tpu_custom_call.1} parent=1 // pred_fallthru
      _
    // Predicated region
    $region50: #{tpu_custom_call.1} parent=1 // pred_check
      _
    $region51: #{tpu_custom_call.1} parent=1 // pred_check_branch
      %415 = sbr.rel (0) target = $region53
    $region52: #{tpu_custom_call.1} parent=1 // pred_region
      %416 = dma.done [#allocation4], 128
    $region53: #{tpu_custom_call.1} parent=1 // pred_fallthru
      _
    %417 = vsyncpa [#allocation3], 1
    %418 = vsyncpa [#allocation6], 1
    %419 = vsyncpa [#allocation4], 1

</llo_original>
